<compile_context>
chip_gen: v7x
topology: tpu7x:2x2x1
jax: 0.10.0
libtpu: 0.0.40
codegen_flags: <defaults>
</compile_context>

<pallas_src>
import functools

import jax
import jax.numpy as jnp
from jax import lax
from jax.experimental import pallas as pl
from jax.experimental.pallas import tpu as pltpu


def _round_up(x, m):
    return (x + m - 1) // m * m


def _default_tanh_dtype():
    """bf16 tanh on v6e / v7x (bf16 EUP/VPU); f32 on v5e and older chips."""
    try:
        kind = jax.devices()[0].device_kind.lower()
    except Exception:
        return jnp.float32
    if "v6" in kind or "v7" in kind:
        return jnp.bfloat16
    return jnp.float32


# ---------------------------------------------------------------------------
# Hoisted batched projection: one big (M, K) @ (K, H) matmul on the MXU,
# tiled over M (folds B*N rows instead of many tiny per-batch matmuls).
# ---------------------------------------------------------------------------
def _proj_kernel(x_ref, w_ref, o_ref):
    o_ref[...] = jnp.dot(x_ref[...], w_ref[...],
                         preferred_element_type=jnp.float32).astype(o_ref.dtype)


def _pallas_matmul(x, w, *, tm_target=256):
    M, K = x.shape
    _, N = w.shape
    tm = min(tm_target, _round_up(M, 8))
    m_pad = _round_up(M, tm)
    if m_pad != M:
        x = jnp.pad(x, ((0, m_pad - M), (0, 0)))
    out = pl.pallas_call(
        _proj_kernel,
        out_shape=jax.ShapeDtypeStruct((m_pad, N), jnp.float32),
        grid=(m_pad // tm,),
        in_specs=[pl.BlockSpec((tm, K), lambda i: (i, 0)),
                  pl.BlockSpec((K, N), lambda i: (0, 0))],
        out_specs=pl.BlockSpec((tm, N), lambda i: (i, 0)),
        compiler_params=pltpu.CompilerParams(
            dimension_semantics=("parallel",)),
    )(x, w)
    return out[:M] if m_pad != M else out


# ---------------------------------------------------------------------------
# Additive attention with flash-style online softmax over key tiles.
# ---------------------------------------------------------------------------
def _attn_kernel(vl_ref, q_ref, k_ref, v_ref, wv_ref, o_ref,
                 m_sc, l_sc, acc_sc, *, tanh_dtype, hloop, nk_real):
    b = pl.program_id(0)
    ki = pl.program_id(2)
    n_k = pl.num_programs(2)
    vl = vl_ref[b]                       # scalar valid length (int32, SMEM)

    tq = q_ref.shape[1]
    if hloop:
        hdim, tk = k_ref.shape[1], k_ref.shape[2]   # k block is (1, H, Tk)
    else:
        tk, hdim = k_ref.shape[1], k_ref.shape[2]   # k block is (1, Tk, H)
    tile_start = ki * tk

    @pl.when(ki == 0)
    def _():
        m_sc[...] = jnp.full_like(m_sc, -jnp.inf)
        l_sc[...] = jnp.zeros_like(l_sc)
        acc_sc[...] = jnp.zeros_like(acc_sc)

    # Skip key tiles that are entirely masked.  Exact w.r.t. the reference:
    # masked scores (-1e6) underflow to exactly 0 in exp(score - m) because m
    # is dominated by a real (tanh-bounded) score.  vl == 0 falls back to the
    # full path so the reference's "uniform over -1e6 scores" behavior holds.
    live = jnp.logical_or(tile_start < vl, vl == 0)

    @pl.when(live)
    def _():
        if hloop:
            # Lane-dense per-hidden-unit accumulation (H < 128).  Each step
            # builds a fully dense (Tq, Tk) tanh slab; w_v is folded in as a
            # scalar per hidden unit.  One-hot masks + keepdims reductions are
            # used for the per-h column / row / scalar extraction (robust
            # Mosaic lowering; the extra VPU work hides under the EUP tanh).
            q = q_ref[0].astype(tanh_dtype)                 # (Tq, H)
            kt = k_ref[0].astype(tanh_dtype)                # (H, Tk)
            wv2 = wv_ref[...]                               # (1, H) f32
            zero = jnp.zeros((), tanh_dtype)
            h_iota = lax.broadcasted_iota(jnp.int32, (1, hdim), 1)
            k_iota = lax.broadcasted_iota(jnp.int32, (hdim, tk), 0)
            scores = jnp.zeros((tq, tk), jnp.float32)
            for h in range(hdim):                           # static unroll
                hmask = h_iota == h
                qcol = jnp.sum(jnp.where(hmask, q, zero),
                               axis=1, keepdims=True)       # (Tq, 1)
                krow = jnp.sum(jnp.where(k_iota == h, kt, zero),
                               axis=0, keepdims=True)       # (1, Tk)
                wvh = jnp.sum(jnp.where(hmask, wv2, 0.0),
                              axis=1, keepdims=True)        # (1, 1) f32
                f = jnp.tanh(qcol + krow).astype(jnp.float32)   # (Tq, Tk)
                scores = scores + wvh * f
        else:
            # H >= 128: the (Tq, Tk, H) broadcast form is already lane-dense.
            q = q_ref[0].astype(tanh_dtype)                      # (Tq, H)
            k = k_ref[0].astype(tanh_dtype)                      # (Tk, H)
            feat = jnp.tanh(q[:, None, :] + k[None, :, :])       # (Tq, Tk, H)
            wv = wv_ref[0]                                       # (H,) f32
            scores = jnp.sum(feat * wv[None, None, :], axis=-1)  # (Tq, Tk)

        col = tile_start + lax.broadcasted_iota(jnp.int32, (tq, tk), 1)
        scores = jnp.where(col < vl, scores, jnp.float32(-1000000.0))
        if nk_real is not None:
            # Padded key columns (beyond the real Nk) must never contribute,
            # even in the degenerate vl == 0 "uniform softmax" case.
            scores = jnp.where(col < nk_real, scores, jnp.float32(-1e30))

        # Online softmax update (all stats in f32).
        m_prev = m_sc[...]
        m_new = jnp.maximum(m_prev, jnp.max(scores, axis=-1, keepdims=True))
        alpha = jnp.exp(m_prev - m_new)
        p = jnp.exp(scores - m_new)
        l_sc[...] = alpha * l_sc[...] + jnp.sum(p, axis=-1, keepdims=True)
        acc_sc[...] = alpha * acc_sc[...] + jnp.dot(
            p.astype(v_ref.dtype), v_ref[0],
            preferred_element_type=jnp.float32)
        m_sc[...] = m_new

    @pl.when(ki == n_k - 1)
    def _():
        o_ref[0] = (acc_sc[...] * pl.reciprocal(l_sc[...], approx=True)
                    ).astype(o_ref.dtype)


def additive_attention(queries, keys, values, valid_lens, wq, wk, wv,
                       *, tanh_dtype=None):
    """queries: (B, Nq, Dq), keys: (B, Nk, Dk), values: (B, Nk, Dv),
    valid_lens: (B,) int, wq: (Dq, H), wk: (Dk, H), wv: (1, H)
    (projection weights stored pre-transposed vs. the nn.Linear weights)."""
    B, Nq, Dq = queries.shape
    _, Nk, Dk = keys.shape
    _, _, Dv = values.shape
    H = wq.shape[1]
    if tanh_dtype is None:
        tanh_dtype = _default_tanh_dtype()

    hloop = H < 128          # lane-dense per-h path only pays off for H < 128

    tq = min(128, _round_up(Nq, 8))
    tk = min(128, _round_up(Nk, 8))
    if not hloop:
        # Bound the (Tq, Tk, H) feature chunk to ~8 MiB f32 so it fits every
        # generation's VMEM (64 MiB/TC on v7x) with pipelining headroom.
        max_tq = max(8, (((8 << 20) // (tk * H * 4)) // 8) * 8)
        tq = min(tq, max_tq)
    nq_pad = _round_up(Nq, tq)
    nk_pad = _round_up(Nk, tk)
    dv_pad = _round_up(Dv, 128)          # lane-dense output -> unmasked stores

    # Hoisted batched projections: one big MXU matmul each over B*N rows.
    q_proj = _pallas_matmul(queries.reshape(B * Nq, Dq).astype(jnp.float32),
                            wq.astype(jnp.float32)).reshape(B, Nq, H)
    k_proj = _pallas_matmul(keys.reshape(B * Nk, Dk).astype(jnp.float32),
                            wk.astype(jnp.float32)).reshape(B, Nk, H)

    # Pad to tile boundaries.  Padded key positions are masked in-kernel and
    # padded value lanes are zero, so results match the unpadded reference.
    q_proj = jnp.pad(q_proj, ((0, 0), (0, nq_pad - Nq), (0, 0)))
    k_proj = jnp.pad(k_proj, ((0, 0), (0, nk_pad - Nk), (0, 0)))
    if hloop:
        # Keys pre-transposed so the key axis is the lane axis in-kernel
        # (wrapper-side layout plumbing, done once by XLA).
        k_in = jnp.transpose(k_proj, (0, 2, 1))               # (B, H, nk_pad)
        k_spec = pl.BlockSpec((1, H, tk), lambda b, qi, ki, vl: (b, 0, ki))
    else:
        k_in = k_proj                                          # (B, nk_pad, H)
        k_spec = pl.BlockSpec((1, tk, H), lambda b, qi, ki, vl: (b, ki, 0))

    v_pad = jnp.pad(values.astype(jnp.float32),
                    ((0, 0), (0, nk_pad - Nk), (0, dv_pad - Dv)))
    vlens = valid_lens.astype(jnp.int32)
    wv_f32 = wv.astype(jnp.float32).reshape(1, H)
    nk_real = Nk if nk_pad != Nk else None

    grid = (B, nq_pad // tq, nk_pad // tk)

    grid_spec = pltpu.PrefetchScalarGridSpec(
        num_scalar_prefetch=1,
        grid=grid,
        in_specs=[
            pl.BlockSpec((1, tq, H), lambda b, qi, ki, vl: (b, qi, 0)),       # q
            k_spec,                                                           # k
            pl.BlockSpec((1, tk, dv_pad), lambda b, qi, ki, vl: (b, ki, 0)),  # v
            pl.BlockSpec((1, H), lambda b, qi, ki, vl: (0, 0)),               # w_v
        ],
        out_specs=pl.BlockSpec((1, tq, dv_pad),
                               lambda b, qi, ki, vl: (b, qi, 0)),
        scratch_shapes=[
            pltpu.VMEM((tq, 1), jnp.float32),        # running max
            pltpu.VMEM((tq, 1), jnp.float32),        # running sum
            pltpu.VMEM((tq, dv_pad), jnp.float32),   # output accumulator
        ],
    )

    out = pl.pallas_call(
        functools.partial(_attn_kernel, tanh_dtype=tanh_dtype,
                          hloop=hloop, nk_real=nk_real),
        out_shape=jax.ShapeDtypeStruct((B, nq_pad, dv_pad), jnp.float32),
        grid_spec=grid_spec,
        compiler_params=pltpu.CompilerParams(
            dimension_semantics=("parallel", "parallel", "arbitrary")),
    )(vlens, q_proj, k_in, v_pad, wv_f32)

    return out[:, :Nq, :Dv]


def _reference(queries, keys, values, valid_lens, wq, wk, wv):
    q = queries @ wq
    k = keys @ wk
    feat = jnp.tanh(q[:, :, None, :] + k[:, None, :, :])
    scores = jnp.einsum("bqkh,h->bqk", feat, wv[0])
    _, _, Nk = scores.shape
    mask = jnp.arange(Nk)[None, None, :] < valid_lens[:, None, None]
    scores = jnp.where(mask, scores, -1000000.0)
    attn = jax.nn.softmax(scores, axis=-1)
    return jnp.einsum("bqk,bkd->bqd", attn, values)


if __name__ == "__main__":
    key = jax.random.PRNGKey(0)

    def run_case(B, Nq, Nk, Dq, Dk, H, Dv, vlens):
        ks = jax.random.split(key, 6)
        queries = jax.random.normal(ks[0], (B, Nq, Dq), jnp.float32)
        keys_in = jax.random.normal(ks[1], (B, Nk, Dk), jnp.float32)
        values = jax.random.normal(ks[2], (B, Nk, Dv), jnp.float32)
        wq = jax.random.normal(ks[3], (Dq, H), jnp.float32) * 0.1
        wk = jax.random.normal(ks[4], (Dk, H), jnp.float32) * 0.1
        wv = jax.random.normal(ks[5], (1, H), jnp.float32) * 0.1
        valid_lens = jnp.array(vlens, dtype=jnp.int32)

        ref = _reference(queries, keys_in, values, valid_lens, wq, wk, wv)

        # Strict path: f32 tanh (valid on every TPU generation).  Tolerance
        # accounts for the approx EUP reciprocal in the softmax normalization.
        out = additive_attention(queries, keys_in, values, valid_lens,
                                 wq, wk, wv, tanh_dtype=jnp.float32)
        out = jax.block_until_ready(out)
        assert out.shape == (B, Nq, Dv)
        assert jnp.allclose(out, ref, atol=2e-3, rtol=2e-3), (
            float(jnp.max(jnp.abs(out - ref))))

        # Device-tuned path (bf16 tanh on v6e/v7x, f32 elsewhere).
        out_auto = jax.block_until_ready(
            additive_attention(queries, keys_in, values, valid_lens,
                               wq, wk, wv))
        assert jnp.allclose(out_auto, ref, atol=3e-2, rtol=3e-2), (
            float(jnp.max(jnp.abs(out_auto - ref))))

    # Small case (module-default sized shapes); H < 128 -> lane-dense per-h path.
    run_case(B=2, Nq=8, Nk=8, Dq=32, Dk=32, H=32, Dv=16, vlens=[3, 6])
    # Multi-key-tile + padded-Nk case: exercises the online softmax across key
    # tiles, masked-tile skipping, padded-key-column masking and the
    # lane-dense (padded) output path.
    run_case(B=2, Nq=16, Nk=200, Dq=32, Dk=32, H=32, Dv=16, vlens=[40, 200])
    # H >= 128 -> broadcast (Tq, Tk, H) path (already lane-dense there).
    run_case(B=2, Nq=8, Nk=128, Dq=16, Dk=16, H=128, Dv=8, vlens=[50, 128])

    print("KERNEL_OK")
</pallas_src>

<mosaic_0001>
module attributes {stable_mosaic.version = 11 : i64} {
  func.func @_proj_kernel(%arg0: i32, %arg1: memref<16x32xf32, #tpu.memory_space<vmem>>, %arg2: memref<32x32xf32, #tpu.memory_space<vmem>>, %arg3: memref<16x32xf32, #tpu.memory_space<vmem>>) attributes {dimension_semantics = [#tpu.dimension_semantics<parallel>], iteration_bounds = array<i64: 1>, scalar_prefetch = 0 : i64, scratch_operands = 0 : i64, tpu.core_type = #tpu.core_type<tc>, window_params = [{transform_indices = @transform_0, window_bounds = array<i64: 16, 32>}, {pipeline_mode = #tpu.pipeline_mode<synchronous>, transform_indices = @transform_1, window_bounds = array<i64: 32, 32>}, {transform_indices = @transform_2, window_bounds = array<i64: 16, 32>}]} {
    %c0 = arith.constant 0 : index
    %c0_0 = arith.constant 0 : index
    %0 = vector.load %arg1[%c0, %c0_0] : memref<16x32xf32, #tpu.memory_space<vmem>>, vector<16x32xf32>
    %c0_1 = arith.constant 0 : index
    %c0_2 = arith.constant 0 : index
    %1 = vector.load %arg2[%c0_1, %c0_2] : memref<32x32xf32, #tpu.memory_space<vmem>>, vector<32x32xf32>
    %cst = arith.constant dense<0.000000e+00> : vector<16x32xf32>
    %2 = tpu.matmul %0, %1, %cst {dimension_numbers = #tpu.dot_dimension_numbers<[1], [0], [0], [1], [0, 0, 1, 1], [], []>} : vector<16x32xf32>, vector<32x32xf32>, vector<16x32xf32> -> vector<16x32xf32>
    %c0_3 = arith.constant 0 : index
    %c0_4 = arith.constant 0 : index
    %3 = vector.load %arg3[%c0_3, %c0_4] : memref<16x32xf32, #tpu.memory_space<vmem>>, vector<16x32xf32>
    tpu.vector_store %arg3[%c0_3, %c0_4], %2 {strides = array<i32>} : memref<16x32xf32, #tpu.memory_space<vmem>>, vector<16x32xf32>,
    return
  }
  func.func @transform_0(%arg0: i32) -> (i32, i32) {
    %c0_i32 = arith.constant 0 : i32
    %c0_i32_0 = arith.constant 0 : i32
    return %arg0, %c0_i32 : i32, i32
  }
  func.func @transform_1(%arg0: i32) -> (i32, i32) {
    %c0_i32 = arith.constant 0 : i32
    %c0_i32_0 = arith.constant 0 : i32
    %c0_i32_1 = arith.constant 0 : i32
    return %c0_i32, %c0_i32_0 : i32, i32
  }
  func.func @transform_2(%arg0: i32) -> (i32, i32) {
    %c0_i32 = arith.constant 0 : i32
    %c0_i32_0 = arith.constant 0 : i32
    return %arg0, %c0_i32 : i32, i32
  }
}

</mosaic_0001>

<llo_original>
// kernel: tpu_custom_call.1
$region0: #{tpu_custom_call.1}
  #allocation0 [shape = 'u32[]', space=smem, size = 0x4, offset = 0x4, fixed_abs, tag = 'smem constant byte address 0x4 - core index']
  #allocation1 [shape = 'u32[144,128]{1,0:T(1,128)}', space=vmem, size = 0x12000, scoped, tag = 'internal scratch']
  %s0 = inlined_call_operand.hbm [shape: f32[16,32], index: 0, kind: input, shape index: {}]
  %s1 = inlined_call_operand.hbm [shape: f32[32,32], index: 1, kind: input, shape index: {}]
  %s2 = inlined_call_operand.hbm [shape: f32[16,32], index: 2, kind: output, shape index: {}]
  %s3 = sld [smem:[#allocation0]]
  $region26: #{tpu_custom_call.1} parent=0
    _
  %s5 = ssub.s32 1, %s3
  %s6 = scalar_select 0, %s5, %s3
  $region1: #{tpu_custom_call.1} parent=0
    #allocation2 [shape = 'u8[8192]{0}', space=vmem, size = 0x2000, scoped, tag = 'input window, operand 0, single buffered']
    #allocation3 [shape = 's32[1]{0}', space=sflag, size = 0x4, scoped, tag = 'scoped memory for tpu_custom_call.1']
    #allocation4 [shape = 's32[1]{0}', space=sflag, size = 0x4, scoped, tag = 'scoped memory for tpu_custom_call.1']
    #allocation5 [shape = 'u8[16384]{0}', space=vmem, size = 0x4000, scoped, tag = 'input window, operand 1, single buffered']
    #allocation6 [shape = 's32[1]{0}', space=sflag, size = 0x4, scoped, tag = 'scoped memory for tpu_custom_call.1']
    #allocation7 [shape = 'u8[8192]{0}', space=vmem, size = 0x2000, scoped, tag = 'output window, operand 0, single buffered']
    %7 = vsyncpa [#allocation3], 0
    %8 = vsyncpa [#allocation6], 0
    %9 = vsyncpa [#allocation4], 0
    // Predicated region
    $region2: #{tpu_custom_call.1} parent=1 // pred_check
      _
    $region3: #{tpu_custom_call.1} parent=1 // pred_check_branch
      %11 = sbr.rel (0) target = $region5
    $region4: #{tpu_custom_call.1} parent=1 // pred_region
      %s13 = ssub.s32 256, 256
      %14 = vsyncadd [#allocation3], %s13
      %s15 = sshll.u32 [#allocation2], 4
      %s16 = int_to_ptr.vmem [resolvable:$true] %s15
      %21 = dma.hbm_to_vmem [thread:$0]  %s0, 256, %s16, [#allocation3], 128, 128, 8
    $region5: #{tpu_custom_call.1} parent=1 // pred_fallthru
      _
    // Predicated region
    $region6: #{tpu_custom_call.1} parent=1 // pred_check
      _
    $region7: #{tpu_custom_call.1} parent=1 // pred_check_branch
      %23 = sbr.rel (0) target = $region9
    $region8: #{tpu_custom_call.1} parent=1 // pred_region
      %s25 = ssub.s32 512, 512
      %26 = vsyncadd [#allocation6], %s25
      %s27 = sshll.u32 [#allocation5], 4
      %s28 = int_to_ptr.vmem [resolvable:$true] %s27
      %33 = dma.hbm_to_vmem [thread:$0]  %s1, 512, %s28, [#allocation6], 128, 128, 8
    $region9: #{tpu_custom_call.1} parent=1 // pred_fallthru
      _
    // Predicated region
    $region10: #{tpu_custom_call.1} parent=1 // pred_check
      _
    $region11: #{tpu_custom_call.1} parent=1 // pred_check_branch
      %35 = sbr.rel (0) target = $region13
    $region12: #{tpu_custom_call.1} parent=1 // pred_region
      %36 = dma.done [#allocation3], 256
    $region13: #{tpu_custom_call.1} parent=1 // pred_fallthru
      _
    // Predicated region
    $region14: #{tpu_custom_call.1} parent=1 // pred_check
      _
    $region15: #{tpu_custom_call.1} parent=1 // pred_check_branch
      %38 = sbr.rel (0) target = $region17
    $region16: #{tpu_custom_call.1} parent=1 // pred_region
      %39 = dma.done [#allocation6], 512
    $region17: #{tpu_custom_call.1} parent=1 // pred_fallthru
      _
    %v40 = vld [vmem:[#allocation2] sm:$0xff]
    %v41 = vld [vmem:[#allocation2 + $0x8] sm:$0xff]
    %v42 = vld [vmem:[#allocation5] sm:$0xff]
    %v43 = vld [vmem:[#allocation5 + $0x8] sm:$0xff]
    %v44 = vld [vmem:[#allocation5 + $0x10] sm:$0xff]
    %v45 = vld [vmem:[#allocation5 + $0x18] sm:$0xff]
    %vm46 = vcmask 261120
    %v48 = vsel %vm46, %v40, 0
    %v51 = vsel %vm46, %v41, 0
    %53 = vmatprep.subr.mxu0 0.0
    %54 = vmatpush1.msra.mxu0 %v42
    %55 = vmatprep.subr.mxu0 0.0
    %56 = vmatpush1.msra.mxu0 %v43
    %57 = vmatprep.subr.mxu0 0.0
    %58 = vmatpush1.msra.mxu0 %v44
    %59 = vmatprep.subr.mxu0 0.0
    %60 = vmatpush1.msra.mxu0 %v45
    %61 = vmatprep.subr.mxu0 0.0
    %62 = vmatpush1.msra.mxu0 0.0
    %63 = vmatprep.subr.mxu0 0.0
    %64 = vmatpush1.msra.mxu0 0.0
    %65 = vmatprep.subr.mxu0 0.0
    %66 = vmatpush1.msra.mxu0 0.0
    %67 = vmatprep.subr.mxu0 0.0
    %68 = vmatpush1.msra.mxu0 0.0
    %69 = vmatprep.subr.mxu0 0.0
    %70 = vmatpush1.msra.mxu0 0.0
    %71 = vmatprep.subr.mxu0 0.0
    %72 = vmatpush1.msra.mxu0 0.0
    %73 = vmatprep.subr.mxu0 0.0
    %74 = vmatpush1.msra.mxu0 0.0
    %75 = vmatprep.subr.mxu0 0.0
    %76 = vmatpush1.msra.mxu0 0.0
    %77 = vmatprep.subr.mxu0 0.0
    %78 = vmatpush1.msra.mxu0 0.0
    %79 = vmatprep.subr.mxu0 0.0
    %80 = vmatpush1.msra.mxu0 0.0
    %81 = vmatprep.subr.mxu0 0.0
    %82 = vmatpush1.msra.mxu0 0.0
    %83 = vmatprep.subr.mxu0 0.0
    %84 = vmatpush1.msra.mxu0 0.0
    %85 = vmatprep.subr.mxu0 0.0
    %86 = vmatpush1.msra.mxu0 0.0
    %87 = vmatprep.subr.mxu0 0.0
    %88 = vmatpush1.msra.mxu0 0.0
    %89 = vmatprep.subr.mxu0 0.0
    %90 = vmatpush1.msra.mxu0 0.0
    %91 = vmatprep.subr.mxu0 0.0
    %92 = vmatpush1.msra.mxu0 0.0
    %93 = vmatprep.subr.mxu0 0.0
    %94 = vmatpush1.msra.mxu0 0.0
    %95 = vmatprep.subr.mxu0 0.0
    %96 = vmatpush1.msra.mxu0 0.0
    %97 = vmatprep.subr.mxu0 0.0
    %98 = vmatpush1.msra.mxu0 0.0
    %99 = vmatprep.subr.mxu0 0.0
    %100 = vmatpush1.msra.mxu0 0.0
    %101 = vmatprep.subr.mxu0 0.0
    %102 = vmatpush1.msra.mxu0 0.0
    %103 = vmatprep.subr.mxu0 0.0
    %104 = vmatpush1.msra.mxu0 0.0
    %105 = vmatprep.subr.mxu0 0.0
    %106 = vmatpush1.msra.mxu0 0.0
    %107 = vmatprep.subr.mxu0 0.0
    %108 = vmatpush1.msra.mxu0 0.0
    %109 = vmatprep.subr.mxu0 0.0
    %110 = vmatpush1.msra.mxu0 0.0
    %111 = vmatprep.subr.mxu0 0.0
    %112 = vmatpush1.msra.mxu0 0.0
    %113 = vmatprep.subr.mxu0 0.0
    %114 = vmatpush1.msra.mxu0 0.0
    %115 = vmatprep.subr.mxu0 0.0
    %116 = vmatpush1.msra.mxu0 0.0
    %117 = vmatprep.mubr.f32.mxu0 0.0
    %118 = vmatmul.mubr.f32.gmra.mrb[0].mxu0 %v48
    %v119 = vpop.f32.mrb[0].mxu0
    %v120 = vadd.f32 0.0, %v119
    %v121 = vpop.f32.mrb[0].mxu0
    %122 = vmatprep.mubr.f32.mxu0 0.0
    %123 = vmatmul.mubr.f32.gmra.mrb[0].mxu0 %v51
    %v124 = vpop.f32.mrb[0].mxu0
    %v125 = vadd.f32 0.0, %v124
    %v126 = vpop.f32.mrb[0].mxu0
    %127 = vdwg.mxu0
    %128 = vst.msk [vmem:[#allocation7] sm:$0xff] %vm46, %v120
    %129 = vst.msk [vmem:[#allocation7 + $0x8] sm:$0xff] %vm46, %v125
    // Predicated region
    $region18: #{tpu_custom_call.1} parent=1 // pred_check
      _
    $region19: #{tpu_custom_call.1} parent=1 // pred_check_branch
      %131 = sbr.rel (0) target = $region21
    $region20: #{tpu_custom_call.1} parent=1 // pred_region
      %s133 = ssub.s32 256, 256
      %134 = vsyncadd [#allocation4], %s133
      %s135 = sshll.u32 [#allocation7], 4
      %s136 = int_to_ptr.vmem [resolvable:$true] %s135
      %141 = dma.vmem_to_hbm [thread:$0]  %s136, 256, %s2, [#allocation4], 128, 128, 8
    $region21: #{tpu_custom_call.1} parent=1 // pred_fallthru
      _
    // Predicated region
    $region22: #{tpu_custom_call.1} parent=1 // pred_check
      _
    $region23: #{tpu_custom_call.1} parent=1 // pred_check_branch
      %143 = sbr.rel (0) target = $region25
    $region24: #{tpu_custom_call.1} parent=1 // pred_region
      %144 = dma.done [#allocation4], 256
    $region25: #{tpu_custom_call.1} parent=1 // pred_fallthru
      _
    %145 = vsyncpa [#allocation3], 1
    %146 = vsyncpa [#allocation6], 1
    %147 = vsyncpa [#allocation4], 1

</llo_original>
